<compile_context>
chip_gen: v7x
topology: tpu7x:2x2x1
jax: 0.10.0
libtpu: 0.0.40
codegen_flags: <defaults>
</compile_context>

<pallas_src>
import functools

import jax
import jax.numpy as jnp
from jax import lax
from jax.experimental import pallas as pl
from jax.experimental.pallas import tpu as pltpu

_LANE = 128
_SUBLANE = 8


def _genmed_partial_kernel(*refs, n_obj, kb, br, r_valid):
    """Grid = (P, KB).  refs = (x_ref, y_0 .. y_{n_obj-1}, out_ref).

    x_ref, y_i_ref : (br, 128) f32 blocks of the flattened vectors.
    out_ref        : (n_obj, 8, 128) f32 lane/sublane partial sums for the
                     current parallel chunk (accumulator across the k axis).
    """
    x_ref = refs[0]
    y_refs = refs[1:1 + n_obj]
    out_ref = refs[1 + n_obj]

    p = pl.program_id(0)
    k = pl.program_id(1)

    @pl.when(k == 0)
    def _init():
        out_ref[...] = jnp.zeros_like(out_ref)

    # Rows of this block that actually exist (the last block / over-covered
    # chunks hold garbage beyond row r_valid -- mask them before accumulating).
    base_row = (p * kb + k) * br
    row_ids = lax.broadcasted_iota(jnp.int32, (br, _LANE), 0) + base_row
    valid = row_ids < r_valid

    x = x_ref[...]
    for i in range(n_obj):                       # n_obj <= 3, static unroll
        d = x - y_refs[i][...]                   # |d|^2 == d*d, abs dropped
        d2 = jnp.where(valid, d * d, 0.0)
        # Fold the BR rows onto 8 sublanes: pure VPU vreg adds, no XLU.
        folded = jnp.sum(d2.reshape(br // _SUBLANE, _SUBLANE, _LANE), axis=0)
        out_ref[i, :, :] = out_ref[i, :, :] + folded


def _round_up(v, m):
    return -(-v // m) * m


def genmed_loss(x, y_list, mode="convex", *, block_rows=512, num_chunks=2):
    """JAX/Pallas equivalent of Loss.forward. Returns a list of (1,) arrays."""
    n_obj = len(y_list)
    x_flat = jnp.asarray(x, jnp.float32).reshape(-1)
    y_flat = [jnp.asarray(yi, jnp.float32).reshape(-1) for yi in y_list]
    n = x_flat.shape[0]
    assert all(int(yi.shape[0]) == n for yi in y_flat)
    assert n >= n_obj        # mirrors the original module's assert

    # View every flattened vector as (r, 128).  When n % 128 == 0 this reshape
    # is free (no HBM copy); otherwise only the ragged lane tail is zero-padded
    # (zeros contribute 0 to the squared-difference sum in both modes).
    r = -(-n // _LANE)
    lane_pad = r * _LANE - n

    def as_slab(a):
        if lane_pad:
            a = jnp.pad(a, (0, lane_pad))
        return a.reshape(r, _LANE)

    x2 = as_slab(x_flat)
    y2 = [as_slab(yi) for yi in y_flat]

    # Row tiling: BR rows per grid step (multiple of 8), KB steps per chunk,
    # P parallel chunks (sharded across TensorCores on v7x, sequential on
    # v5e/v6e).  VMEM/step ~= (n_obj+1) * BR*128*4B * 2 pipeline buffers.
    br = min(_round_up(block_rows, _SUBLANE), _round_up(r, _SUBLANE))
    nb = -(-r // br)                       # total row-blocks
    p_chunks = max(1, min(num_chunks, nb))
    kb = -(-nb // p_chunks)                # row-blocks per chunk

    def in_map(p, k):
        # Clamp so over-covered chunks never request an out-of-range block;
        # their contribution is masked to zero inside the kernel.
        return (jnp.minimum(p * kb + k, nb - 1), 0)

    kernel = functools.partial(
        _genmed_partial_kernel, n_obj=n_obj, kb=kb, br=br, r_valid=r)

    bytes_accessed = 4 * ((n_obj + 1) * r * _LANE
                          + n_obj * p_chunks * _SUBLANE * _LANE)
    partials = pl.pallas_call(
        kernel,
        out_shape=jax.ShapeDtypeStruct(
            (n_obj, p_chunks * _SUBLANE, _LANE), jnp.float32),
        grid=(p_chunks, kb),
        in_specs=[pl.BlockSpec((br, _LANE), in_map)
                  for _ in range(n_obj + 1)],
        out_specs=pl.BlockSpec((n_obj, _SUBLANE, _LANE),
                               lambda p, k: (0, p, 0)),
        compiler_params=pltpu.CompilerParams(
            dimension_semantics=("parallel", "arbitrary")),
        cost_estimate=pl.CostEstimate(
            flops=3 * n_obj * n, transcendentals=0,
            bytes_accessed=bytes_accessed),
    )(x2, *y2)

    # Tiny epilogue in plain JAX: combine chunk/sublane/lane partial sums and
    # apply the mode-specific scaling (sqrt must come after the full sum).
    ss = jnp.sum(partials, axis=(1, 2))            # (n_obj,)
    f = 0.5 * ss if mode == "convex" else 0.5 * jnp.sqrt(ss)
    # TODO(synk): the original module's logging.debug side-effect is omitted.
    return [f[i].reshape(-1) for i in range(n_obj)]


if __name__ == "__main__":
    key = jax.random.PRNGKey(0)

    def reference(x, y_list, mode):
        out = []
        for yi in y_list:
            ss = jnp.sum(jnp.abs(x - yi) ** 2)
            val = 0.5 * ss if mode == "convex" else 0.5 * jnp.sqrt(ss)
            out.append(val.reshape(-1))
        return out

    # Case 1: 3 objectives, ragged length (not a multiple of 128), single block.
    n_obj, n = 3, 200
    kx, *kys = jax.random.split(key, 1 + n_obj)
    x = jax.random.normal(kx, (n,), dtype=jnp.float32)
    y = [jax.random.normal(kk, (n,), dtype=jnp.float32) for kk in kys]
    for mode in ("convex", "norm"):
        got = [jax.block_until_ready(v) for v in genmed_loss(x, y, mode=mode)]
        want = reference(x, y, mode)
        for g, w in zip(got, want):
            assert jnp.allclose(g, w, rtol=1e-4, atol=1e-5), (mode, g, w)

    # Case 2: exercises multi-block / multi-chunk / clamped-tail paths.
    n_obj2, n2 = 2, 5000
    k0, ka, kbk = jax.random.split(jax.random.PRNGKey(0), 3)
    xb = jax.random.normal(k0, (n2,), dtype=jnp.float32)
    yb = [jax.random.normal(ka, (n2,), dtype=jnp.float32),
          jax.random.normal(kbk, (n2,), dtype=jnp.float32)]
    got2 = [jax.block_until_ready(v)
            for v in genmed_loss(xb, yb, mode="convex",
                                 block_rows=8, num_chunks=2)]
    want2 = reference(xb, yb, "convex")
    for g, w in zip(got2, want2):
        assert jnp.allclose(g, w, rtol=1e-4, atol=1e-4), (g, w)

    print("KERNEL_OK")
</pallas_src>

<mosaic_0001>
module attributes {stable_mosaic.version = 11 : i64} {
  func.func @_genmed_partial_kernel(%arg0: i32, %arg1: i32, %arg2: memref<8x128xf32, #tpu.memory_space<vmem>>, %arg3: memref<8x128xf32, #tpu.memory_space<vmem>>, %arg4: memref<8x128xf32, #tpu.memory_space<vmem>>, %arg5: memref<8x128xf32, #tpu.memory_space<vmem>>, %arg6: memref<3x8x128xf32, #tpu.memory_space<vmem>>) attributes {dimension_semantics = [#tpu.dimension_semantics<parallel>, #tpu.dimension_semantics<arbitrary>], iteration_bounds = array<i64: 1, 1>, scalar_prefetch = 0 : i64, scratch_operands = 0 : i64, tpu.core_type = #tpu.core_type<tc>, window_params = [{transform_indices = @transform_0, window_bounds = array<i64: 8, 128>}, {transform_indices = @transform_1, window_bounds = array<i64: 8, 128>}, {transform_indices = @transform_2, window_bounds = array<i64: 8, 128>}, {transform_indices = @transform_3, window_bounds = array<i64: 8, 128>}, {transform_indices = @transform_4, window_bounds = array<i64: 3, 8, 128>}]} {
    %c0_i32 = arith.constant 0 : i32
    %0 = arith.cmpi eq, %arg1, %c0_i32 : i32
    %1 = arith.extui %0 : i1 to i32
    %c0_i32_0 = arith.constant 0 : i32
    %2 = arith.cmpi ne, %1, %c0_i32_0 : i32
    scf.if %2 {
      %cst_29 = arith.constant 0.000000e+00 : f32
      %51 = vector.broadcast %cst_29 : f32 to vector<3x8x128xf32>
      %c0_30 = arith.constant 0 : index
      %c0_31 = arith.constant 0 : index
      %c0_32 = arith.constant 0 : index
      %52 = vector.load %arg6[%c0_30, %c0_31, %c0_32] : memref<3x8x128xf32, #tpu.memory_space<vmem>>, vector<3x8x128xf32>
      tpu.vector_store %arg6[%c0_30, %c0_31, %c0_32], %51 {strides = array<i32>} : memref<3x8x128xf32, #tpu.memory_space<vmem>>, vector<3x8x128xf32>,
    } else {
    }
    %c1_i32 = arith.constant 1 : i32
    %3 = arith.muli %arg0, %c1_i32 : i32
    %4 = arith.addi %3, %arg1 : i32
    %c8_i32 = arith.constant 8 : i32
    %5 = arith.muli %4, %c8_i32 : i32
    %6 = tpu.iota {dimensions = array<i32: 0>} : vector<8x128xi32>
    %7 = vector.broadcast %5 : i32 to vector<8x128xi32>
    %8 = arith.addi %6, %7 : vector<8x128xi32>
    %c2_i32 = arith.constant 2 : i32
    %9 = vector.broadcast %c2_i32 : i32 to vector<8x128xi32>
    %10 = arith.cmpi slt, %8, %9 : vector<8x128xi32>
    %c0 = arith.constant 0 : index
    %c0_1 = arith.constant 0 : index
    %11 = vector.load %arg2[%c0, %c0_1] : memref<8x128xf32, #tpu.memory_space<vmem>>, vector<8x128xf32>
    %c0_2 = arith.constant 0 : index
    %c0_3 = arith.constant 0 : index
    %12 = vector.load %arg3[%c0_2, %c0_3] : memref<8x128xf32, #tpu.memory_space<vmem>>, vector<8x128xf32>
    %13 = arith.subf %11, %12 : vector<8x128xf32>
    %14 = arith.mulf %13, %13 : vector<8x128xf32>
    %cst = arith.constant 0.000000e+00 : f32
    %15 = vector.broadcast %cst : f32 to vector<8x128xf32>
    %16 = arith.select %10, %14, %15 : vector<8x128xi1>, vector<8x128xf32>
    %17 = vector.shape_cast %16 : vector<8x128xf32> to vector<1x8x128xf32>
    %cst_4 = arith.constant dense<0.000000e+00> : vector<8x128xf32>
    %18 = vector.multi_reduction <add>, %17, %cst_4 [0] : vector<1x8x128xf32> to vector<8x128xf32>
    %c0_5 = arith.constant 0 : index
    %c0_6 = arith.constant 0 : index
    %c0_7 = arith.constant 0 : index
    %19 = vector.load %arg6[%c0_5, %c0_6, %c0_7] : memref<3x8x128xf32, #tpu.memory_space<vmem>>, vector<1x8x128xf32>
    %20 = vector.shape_cast %19 : vector<1x8x128xf32> to vector<8x128xf32>
    %21 = arith.addf %20, %18 : vector<8x128xf32>
    %c0_8 = arith.constant 0 : index
    %c0_9 = arith.constant 0 : index
    %c0_10 = arith.constant 0 : index
    %22 = vector.load %arg6[%c0_8, %c0_9, %c0_10] : memref<3x8x128xf32, #tpu.memory_space<vmem>>, vector<1x8x128xf32>
    %23 = vector.shape_cast %22 : vector<1x8x128xf32> to vector<8x128xf32>
    %24 = vector.shape_cast %21 : vector<8x128xf32> to vector<1x8x128xf32>
    tpu.vector_store %arg6[%c0_8, %c0_9, %c0_10], %24 {strides = array<i32>} : memref<3x8x128xf32, #tpu.memory_space<vmem>>, vector<1x8x128xf32>,
    %c0_11 = arith.constant 0 : index
    %c0_12 = arith.constant 0 : index
    %25 = vector.load %arg4[%c0_11, %c0_12] : memref<8x128xf32, #tpu.memory_space<vmem>>, vector<8x128xf32>
    %26 = arith.subf %11, %25 : vector<8x128xf32>
    %27 = arith.mulf %26, %26 : vector<8x128xf32>
    %cst_13 = arith.constant 0.000000e+00 : f32
    %28 = vector.broadcast %cst_13 : f32 to vector<8x128xf32>
    %29 = arith.select %10, %27, %28 : vector<8x128xi1>, vector<8x128xf32>
    %30 = vector.shape_cast %29 : vector<8x128xf32> to vector<1x8x128xf32>
    %cst_14 = arith.constant dense<0.000000e+00> : vector<8x128xf32>
    %31 = vector.multi_reduction <add>, %30, %cst_14 [0] : vector<1x8x128xf32> to vector<8x128xf32>
    %c1 = arith.constant 1 : index
    %c0_15 = arith.constant 0 : index
    %c0_16 = arith.constant 0 : index
    %32 = vector.load %arg6[%c1, %c0_15, %c0_16] : memref<3x8x128xf32, #tpu.memory_space<vmem>>, vector<1x8x128xf32>
    %33 = vector.shape_cast %32 : vector<1x8x128xf32> to vector<8x128xf32>
    %34 = arith.addf %33, %31 : vector<8x128xf32>
    %c1_17 = arith.constant 1 : index
    %c0_18 = arith.constant 0 : index
    %c0_19 = arith.constant 0 : index
    %35 = vector.load %arg6[%c1_17, %c0_18, %c0_19] : memref<3x8x128xf32, #tpu.memory_space<vmem>>, vector<1x8x128xf32>
    %36 = vector.shape_cast %35 : vector<1x8x128xf32> to vector<8x128xf32>
    %37 = vector.shape_cast %34 : vector<8x128xf32> to vector<1x8x128xf32>
    tpu.vector_store %arg6[%c1_17, %c0_18, %c0_19], %37 {strides = array<i32>} : memref<3x8x128xf32, #tpu.memory_space<vmem>>, vector<1x8x128xf32>,
    %c0_20 = arith.constant 0 : index
    %c0_21 = arith.constant 0 : index
    %38 = vector.load %arg5[%c0_20, %c0_21] : memref<8x128xf32, #tpu.memory_space<vmem>>, vector<8x128xf32>
    %39 = arith.subf %11, %38 : vector<8x128xf32>
    %40 = arith.mulf %39, %39 : vector<8x128xf32>
    %cst_22 = arith.constant 0.000000e+00 : f32
    %41 = vector.broadcast %cst_22 : f32 to vector<8x128xf32>
    %42 = arith.select %10, %40, %41 : vector<8x128xi1>, vector<8x128xf32>
    %43 = vector.shape_cast %42 : vector<8x128xf32> to vector<1x8x128xf32>
    %cst_23 = arith.constant dense<0.000000e+00> : vector<8x128xf32>
    %44 = vector.multi_reduction <add>, %43, %cst_23 [0] : vector<1x8x128xf32> to vector<8x128xf32>
    %c2 = arith.constant 2 : index
    %c0_24 = arith.constant 0 : index
    %c0_25 = arith.constant 0 : index
    %45 = vector.load %arg6[%c2, %c0_24, %c0_25] : memref<3x8x128xf32, #tpu.memory_space<vmem>>, vector<1x8x128xf32>
    %46 = vector.shape_cast %45 : vector<1x8x128xf32> to vector<8x128xf32>
    %47 = arith.addf %46, %44 : vector<8x128xf32>
    %c2_26 = arith.constant 2 : index
    %c0_27 = arith.constant 0 : index
    %c0_28 = arith.constant 0 : index
    %48 = vector.load %arg6[%c2_26, %c0_27, %c0_28] : memref<3x8x128xf32, #tpu.memory_space<vmem>>, vector<1x8x128xf32>
    %49 = vector.shape_cast %48 : vector<1x8x128xf32> to vector<8x128xf32>
    %50 = vector.shape_cast %47 : vector<8x128xf32> to vector<1x8x128xf32>
    tpu.vector_store %arg6[%c2_26, %c0_27, %c0_28], %50 {strides = array<i32>} : memref<3x8x128xf32, #tpu.memory_space<vmem>>, vector<1x8x128xf32>,
    return
  }
  func.func @transform_0(%arg0: i32, %arg1: i32) -> (i32, i32) {
    %c1_i32 = arith.constant 1 : i32
    %0 = arith.muli %arg0, %c1_i32 : i32
    %1 = arith.addi %0, %arg1 : i32
    %c0_i32 = arith.constant 0 : i32
    %2 = arith.minsi %1, %c0_i32 : i32
    %c0_i32_0 = arith.constant 0 : i32
    %c0_i32_1 = arith.constant 0 : i32
    return %2, %c0_i32_0 : i32, i32
  }
  func.func @transform_1(%arg0: i32, %arg1: i32) -> (i32, i32) {
    %c1_i32 = arith.constant 1 : i32
    %0 = arith.muli %arg0, %c1_i32 : i32
    %1 = arith.addi %0, %arg1 : i32
    %c0_i32 = arith.constant 0 : i32
    %2 = arith.minsi %1, %c0_i32 : i32
    %c0_i32_0 = arith.constant 0 : i32
    %c0_i32_1 = arith.constant 0 : i32
    return %2, %c0_i32_0 : i32, i32
  }
  func.func @transform_2(%arg0: i32, %arg1: i32) -> (i32, i32) {
    %c1_i32 = arith.constant 1 : i32
    %0 = arith.muli %arg0, %c1_i32 : i32
    %1 = arith.addi %0, %arg1 : i32
    %c0_i32 = arith.constant 0 : i32
    %2 = arith.minsi %1, %c0_i32 : i32
    %c0_i32_0 = arith.constant 0 : i32
    %c0_i32_1 = arith.constant 0 : i32
    return %2, %c0_i32_0 : i32, i32
  }
  func.func @transform_3(%arg0: i32, %arg1: i32) -> (i32, i32) {
    %c1_i32 = arith.constant 1 : i32
    %0 = arith.muli %arg0, %c1_i32 : i32
    %1 = arith.addi %0, %arg1 : i32
    %c0_i32 = arith.constant 0 : i32
    %2 = arith.minsi %1, %c0_i32 : i32
    %c0_i32_0 = arith.constant 0 : i32
    %c0_i32_1 = arith.constant 0 : i32
    return %2, %c0_i32_0 : i32, i32
  }
  func.func @transform_4(%arg0: i32, %arg1: i32) -> (i32, i32, i32) {
    %c0_i32 = arith.constant 0 : i32
    %c0_i32_0 = arith.constant 0 : i32
    %c0_i32_1 = arith.constant 0 : i32
    return %c0_i32, %arg0, %c0_i32_0 : i32, i32, i32
  }
}

</mosaic_0001>

<llo_original>
// kernel: tpu_custom_call.1
$region0: #{tpu_custom_call.1}
  #allocation0 [shape = 'u32[]', space=smem, size = 0x4, offset = 0x4, fixed_abs, tag = 'smem constant byte address 0x4 - core index']
  #allocation1 [shape = 'u32[144,128]{1,0:T(1,128)}', space=vmem, size = 0x12000, scoped, tag = 'internal scratch']
  %s0 = inlined_call_operand.hbm [shape: f32[2,128], index: 0, kind: input, shape index: {}]
  %s1 = inlined_call_operand.vmem [shape: f32[2,128], index: 1, kind: input, shape index: {}]
  %s2 = inlined_call_operand.vmem [shape: f32[2,128], index: 2, kind: input, shape index: {}]
  %s3 = inlined_call_operand.vmem [shape: f32[2,128], index: 3, kind: input, shape index: {}]
  %s4 = inlined_call_operand.hbm [shape: f32[3,8,128], index: 4, kind: output, shape index: {}]
  %s5 = sld [smem:[#allocation0]]
  $region34: #{tpu_custom_call.1} parent=0
    _
  %s7 = ssub.s32 1, %s5
  %s8 = scalar_select 0, %s7, %s5
  $region1: #{tpu_custom_call.1} parent=0
    #allocation2 [shape = 'u8[4096]{0}', space=vmem, size = 0x1000, scoped, tag = 'input window, operand 0, single buffered']
    #allocation3 [shape = 's32[1]{0}', space=sflag, size = 0x4, scoped, tag = 'scoped memory for tpu_custom_call.1']
    #allocation4 [shape = 's32[1]{0}', space=sflag, size = 0x4, scoped, tag = 'scoped memory for tpu_custom_call.1']
    #allocation5 [shape = 'u8[12288]{0}', space=vmem, size = 0x3000, scoped, tag = 'output window, operand 0, single buffered']
    %9 = vsyncpa [#allocation3], 0
    %10 = vsyncpa [#allocation4], 0
    // Predicated region
    $region2: #{tpu_custom_call.1} parent=1 // pred_check
      _
    $region3: #{tpu_custom_call.1} parent=1 // pred_check_branch
      %12 = sbr.rel (0) target = $region5
    $region4: #{tpu_custom_call.1} parent=1 // pred_region
      %s13 = sadd.s32 0, 0
      %p14 = scmp.lt.s32.totalorder %s13, 0
      %s15 = scalar_select %p14, %s13, 0
      %s16 = smul.u32 4, %s15
      %s17 = ssub.s32 1, %s16
      %s18 = smul.u32 32, %s17
      %s20 = ssub.s32 128, %s18
      %21 = vsyncadd [#allocation3], %s20
      %p22 = scmp.ne.s32.totalorder 0, %s18
      %s23 = smul.addr %s16, 32
      %s24 = scalar_lea.hbm %s0, %s23
      %s25 = smul.u32 2, %s17
      %s26 = sshll.u32 [#allocation2], 4
      %s27 = int_to_ptr.vmem [resolvable:$true] %s26
      %s28 = sshll.u32 %s25, 4
      %32 = dma.hbm_to_vmem [thread:$0]  (%p22), %s24, %s28, %s27, [#allocation3], 32, 32, 2
    $region5: #{tpu_custom_call.1} parent=1 // pred_fallthru
      _
    // Predicated region
    $region6: #{tpu_custom_call.1} parent=1 // pred_check
      _
    $region7: #{tpu_custom_call.1} parent=1 // pred_check_branch
      %34 = sbr.rel (0) target = $region9
    $region8: #{tpu_custom_call.1} parent=1 // pred_region
      %s35 = sadd.s32 0, 0
      %p36 = scmp.lt.s32.totalorder %s35, 0
      %s37 = scalar_select %p36, %s35, 0
      %s38 = smul.u32 4, %s37
      %s39 = ssub.s32 1, %s38
      %s40 = smul.u32 32, %s39
      %p41 = scmp.lt.s32.totalorder %s38, 0
      %s42 = scalar_select %p41, %s38, 0
      %s43 = smul.addr %s42, 2
      %s44 = scalar_lea.vmem %s1, %s43
      %s45 = sadd.s32 0, 0
      %p46 = scmp.lt.s32.totalorder %s45, 0
      %s47 = scalar_select %p46, %s45, 0
      %s48 = smul.u32 4, %s47
      %s49 = ssub.s32 1, %s48
      %s50 = smul.u32 32, %s49
    $region9: #{tpu_custom_call.1} parent=1 // pred_fallthru
      _
    // Predicated region
    $region10: #{tpu_custom_call.1} parent=1 // pred_check
      _
    $region11: #{tpu_custom_call.1} parent=1 // pred_check_branch
      %52 = sbr.rel (0) target = $region13
    $region12: #{tpu_custom_call.1} parent=1 // pred_region
      %s53 = sadd.s32 0, 0
      %p54 = scmp.lt.s32.totalorder %s53, 0
      %s55 = scalar_select %p54, %s53, 0
      %s56 = smul.u32 4, %s55
      %s57 = ssub.s32 1, %s56
      %s58 = smul.u32 32, %s57
      %p59 = scmp.lt.s32.totalorder %s56, 0
      %s60 = scalar_select %p59, %s56, 0
      %s61 = smul.addr %s60, 2
      %s62 = scalar_lea.vmem %s2, %s61
      %s63 = sadd.s32 0, 0
      %p64 = scmp.lt.s32.totalorder %s63, 0
      %s65 = scalar_select %p64, %s63, 0
      %s66 = smul.u32 4, %s65
      %s67 = ssub.s32 1, %s66
      %s68 = smul.u32 32, %s67
    $region13: #{tpu_custom_call.1} parent=1 // pred_fallthru
      _
    // Predicated region
    $region14: #{tpu_custom_call.1} parent=1 // pred_check
      _
    $region15: #{tpu_custom_call.1} parent=1 // pred_check_branch
      %70 = sbr.rel (0) target = $region17
    $region16: #{tpu_custom_call.1} parent=1 // pred_region
      %s71 = sadd.s32 0, 0
      %p72 = scmp.lt.s32.totalorder %s71, 0
      %s73 = scalar_select %p72, %s71, 0
      %s74 = smul.u32 4, %s73
      %s75 = ssub.s32 1, %s74
      %s76 = smul.u32 32, %s75
      %p77 = scmp.lt.s32.totalorder %s74, 0
      %s78 = scalar_select %p77, %s74, 0
      %s79 = smul.addr %s78, 2
      %s80 = scalar_lea.vmem %s3, %s79
      %s81 = sadd.s32 0, 0
      %p82 = scmp.lt.s32.totalorder %s81, 0
      %s83 = scalar_select %p82, %s81, 0
      %s84 = smul.u32 4, %s83
      %s85 = ssub.s32 1, %s84
      %s86 = smul.u32 32, %s85
    $region17: #{tpu_custom_call.1} parent=1 // pred_fallthru
      _
    // Predicated region
    $region18: #{tpu_custom_call.1} parent=1 // pred_check
      _
    $region19: #{tpu_custom_call.1} parent=1 // pred_check_branch
      %88 = sbr.rel (0) target = $region21
    $region20: #{tpu_custom_call.1} parent=1 // pred_region
      %89 = dma.done [#allocation3], 128
    $region21: #{tpu_custom_call.1} parent=1 // pred_fallthru
      _
    %s90 = sadd.s32 0, 0
    %p91 = scmp.lt.s32.totalorder %s90, 0
    %s92 = scalar_select %p91, %s90, 0
    %s93 = smul.u32 4, %s92
    %s94 = ssub.s32 1, %s93
    %s95 = smul.u32 32, %s94
    %p96 = scmp.lt.s32.totalorder %s93, 0
    %s97 = scalar_select %p96, %s93, 0
    %s98 = smul.addr %s97, 2
    %s99 = scalar_lea.vmem %s1, %s98
    %s100 = sadd.s32 0, 0
    %p101 = scmp.lt.s32.totalorder %s100, 0
    %s102 = scalar_select %p101, %s100, 0
    %s103 = smul.u32 4, %s102
    %s104 = ssub.s32 1, %s103
    %s105 = smul.u32 32, %s104
    %p106 = scmp.lt.s32.totalorder %s103, 0
    %s107 = scalar_select %p106, %s103, 0
    %s108 = smul.addr %s107, 2
    %s109 = scalar_lea.vmem %s2, %s108
    %s110 = sadd.s32 0, 0
    %p111 = scmp.lt.s32.totalorder %s110, 0
    %s112 = scalar_select %p111, %s110, 0
    %s113 = smul.u32 4, %s112
    %s114 = ssub.s32 1, %s113
    %s115 = smul.u32 32, %s114
    %p116 = scmp.lt.s32.totalorder %s113, 0
    %s117 = scalar_select %p116, %s113, 0
    %s118 = smul.addr %s117, 2
    %s119 = scalar_lea.vmem %s3, %s118
    %s120 = sadd.s32 0, 0
    %p121 = scmp.lt.s32.totalorder %s120, 0
    %s122 = scalar_select %p121, %s120, 0
    %s123 = smul.u32 4, %s122
    %s124 = ssub.s32 1, %s123
    %s125 = smul.u32 32, %s124
    %s126 = sadd.s32 0, 0
    %p127 = scmp.lt.s32.totalorder %s126, 0
    %s128 = scalar_select %p127, %s126, 0
    %s129 = smul.u32 4, %s128
    %s130 = ssub.s32 1, %s129
    %s131 = smul.u32 32, %s130
    %p132 = scmp.lt.s32.totalorder %s129, 0
    %s133 = scalar_select %p132, %s129, 0
    %s134 = smul.addr %s133, 2
    %s135 = scalar_lea.vmem %s1, %s134
    %s136 = sadd.s32 0, 0
    %p137 = scmp.lt.s32.totalorder %s136, 0
    %s138 = scalar_select %p137, %s136, 0
    %s139 = smul.u32 4, %s138
    %s140 = ssub.s32 1, %s139
    %s141 = smul.u32 32, %s140
    %s142 = sadd.s32 0, 0
    %p143 = scmp.lt.s32.totalorder %s142, 0
    %s144 = scalar_select %p143, %s142, 0
    %s145 = smul.u32 4, %s144
    %s146 = ssub.s32 1, %s145
    %s147 = smul.u32 32, %s146
    %p148 = scmp.lt.s32.totalorder %s145, 0
    %s149 = scalar_select %p148, %s145, 0
    %s150 = smul.addr %s149, 2
    %s151 = scalar_lea.vmem %s2, %s150
    %s152 = sadd.s32 0, 0
    %p153 = scmp.lt.s32.totalorder %s152, 0
    %s154 = scalar_select %p153, %s152, 0
    %s155 = smul.u32 4, %s154
    %s156 = ssub.s32 1, %s155
    %s157 = smul.u32 32, %s156
    %s158 = sadd.s32 0, 0
    %p159 = scmp.lt.s32.totalorder %s158, 0
    %s160 = scalar_select %p159, %s158, 0
    %s161 = smul.u32 4, %s160
    %s162 = ssub.s32 1, %s161
    %s163 = smul.u32 32, %s162
    %p164 = scmp.lt.s32.totalorder %s161, 0
    %s165 = scalar_select %p164, %s161, 0
    %s166 = smul.addr %s165, 2
    %s167 = scalar_lea.vmem %s3, %s166
    %s168 = sadd.s32 0, 0
    %p169 = scmp.lt.s32.totalorder %s168, 0
    %s170 = scalar_select %p169, %s168, 0
    %s171 = smul.u32 4, %s170
    %s172 = ssub.s32 1, %s171
    %s173 = smul.u32 32, %s172
    %p174 = scmp.eq.s32.totalorder 0, 0
    // Predicated region
    $region22: #{tpu_custom_call.1} parent=1 // pred_check
      %p175 = pneg %p174
    $region23: #{tpu_custom_call.1} parent=1 // pred_check_branch
      %177 = sbr.rel (%p175) target = $region25
    $region24: #{tpu_custom_call.1} parent=1 // pred_region
      %178 = vst [vmem:[#allocation5] sm:$0xff] 0.0
      %179 = vst [vmem:[#allocation5 + $0x8] sm:$0xff] 0.0
      %180 = vst [vmem:[#allocation5 + $0x10] sm:$0xff] 0.0
    $region25: #{tpu_custom_call.1} parent=1 // pred_fallthru
      _
    %s181 = sadd.s32 0, 0
    %s182 = smul.u32 %s181, 8
    %v183 = vlaneseq
    %v184 = vshrl.u32 %v183, 7
    %v185 = vstv %s182
    %v186 = vadd.s32 %v184, %v185
    %vm187 = vcmp.lt.s32.totalorder %v186, 2
    %v188 = vld [vmem:[#allocation2] sm:$0xff]
    %v189 = vld [vmem:[%s135] sm:$0xff]
    %v190 = vsub.f32 %v188, %v189
    %v191 = vmul.f32 %v190, %v190
    %v192 = vsel %vm187, %v191, 0.0
    %v193 = vadd.f32 %v192, 0.0
    %v194 = vld [vmem:[#allocation5] sm:$0xff]
    %v195 = vadd.f32 %v194, %v193
    %196 = vst [vmem:[#allocation5] sm:$0xff] %v195
    %v197 = vld [vmem:[%s151] sm:$0xff]
    %v198 = vsub.f32 %v188, %v197
    %v199 = vmul.f32 %v198, %v198
    %v200 = vsel %vm187, %v199, 0.0
    %v201 = vadd.f32 %v200, 0.0
    %s202 = scalar_lea.vmem [#allocation5], 8
    %v203 = vld [vmem:[%s202] sm:$0xff]
    %v204 = vadd.f32 %v203, %v201
    %205 = vst [vmem:[%s202] sm:$0xff] %v204
    %v206 = vld [vmem:[%s167] sm:$0xff]
    %v207 = vsub.f32 %v188, %v206
    %v208 = vmul.f32 %v207, %v207
    %v209 = vsel %vm187, %v208, 0.0
    %v210 = vadd.f32 %v209, 0.0
    %s211 = scalar_lea.vmem [#allocation5], 16
    %v212 = vld [vmem:[%s211] sm:$0xff]
    %v213 = vadd.f32 %v212, %v210
    %214 = vst [vmem:[%s211] sm:$0xff] %v213
    // Predicated region
    $region26: #{tpu_custom_call.1} parent=1 // pred_check
      _
    $region27: #{tpu_custom_call.1} parent=1 // pred_check_branch
      %216 = sbr.rel (0) target = $region29
    $region28: #{tpu_custom_call.1} parent=1 // pred_region
      %s218 = ssub.s32 384, 384
      %219 = vsyncadd [#allocation4], %s218
      %s220 = sshll.u32 [#allocation5], 4
      %s221 = int_to_ptr.vmem [resolvable:$true] %s220
      %226 = dma.vmem_to_hbm [thread:$0]  %s221, 384, %s4, [#allocation4], 128, 128, 8
    $region29: #{tpu_custom_call.1} parent=1 // pred_fallthru
      _
    // Predicated region
    $region30: #{tpu_custom_call.1} parent=1 // pred_check
      _
    $region31: #{tpu_custom_call.1} parent=1 // pred_check_branch
      %228 = sbr.rel (0) target = $region33
    $region32: #{tpu_custom_call.1} parent=1 // pred_region
      %229 = dma.done [#allocation4], 384
    $region33: #{tpu_custom_call.1} parent=1 // pred_fallthru
      _
    %230 = vsyncpa [#allocation3], 1
    %231 = vsyncpa [#allocation4], 1

</llo_original>
